<compile_context>
chip_gen: v5e
topology: v5e:2x2
jax: 0.10.0
libtpu: 0.0.40
codegen_flags: <defaults>
</compile_context>

<pallas_src>
import jax
import jax.numpy as jnp
from jax.experimental import pallas as pl
from jax.experimental.pallas import tpu as pltpu


# ----------------------------------------------------------------------------
# Kernel body: Nb images x (Cin, TL) -> Nb images x (Cout, TL)
# ----------------------------------------------------------------------------
def _conv1x1_kernel(x_ref, w_ref, b_ref, o_ref):
    # x_ref: (Nb, Cin, TL)  w_ref: (Cout, Cin)  b_ref: (Cout, 1)  o_ref: (Nb, Cout, TL)
    w = w_ref[...]
    b = b_ref[...]  # f32
    nb = x_ref.shape[0]
    for i in range(nb):  # static unroll (Nb is small)
        y = jnp.dot(w, x_ref[i], preferred_element_type=jnp.float32)
        o_ref[i] = (y + b).astype(o_ref.dtype)


# ----------------------------------------------------------------------------
# Tiling heuristics
# ----------------------------------------------------------------------------
def _vmem_budget_bytes():
    """Generation-aware double-buffered working-set budget."""
    try:
        cap = int(pltpu.get_tpu_info().vmem_capacity_bytes)
    except Exception:  # pragma: no cover - conservative fallback
        cap = 64 * 1024 * 1024
    if cap <= 64 * 1024 * 1024:        # v7x: 64 MiB physical / 32 MiB scoped default
        return 16 * 1024 * 1024
    return 24 * 1024 * 1024            # v5e / v6e: 128 MiB physical


def _choose_tiling(n, cin, cout, hwp, in_item, out_item, budget):
    """Pick (images-per-step Nb, lane tile TL).

    TL: largest multiple of 128 dividing hwp that keeps the double-buffered
        in+out tiles inside `budget` (output counted at out_item, e.g. f32).
    Then shrink TL (if possible) so the total grid has >= 4 steps (megacore),
    and finally batch images per step until each step moves >= ~512 KiB of
    input, without dropping below 2 grid steps or overflowing the budget.
    """
    w_bytes = cout * cin * in_item + cout * 4
    bytes_per_lane = 2 * (in_item * cin + out_item * cout)  # double-buffered
    max_tl = max(128, ((budget - w_bytes) // max(bytes_per_lane, 1)) // 128 * 128)
    tl = min(hwp, max_tl)
    while hwp % tl:
        tl -= 128  # hwp is a multiple of 128, terminates at 128 at worst

    # Prefer >= 4 total grid steps so both v7x cores stay busy and pipelining works.
    min_steps = 4
    while n * (hwp // tl) < min_steps and tl > 128:
        tl2 = tl - 128
        while tl2 > 128 and hwp % tl2:
            tl2 -= 128
        if hwp % tl2:
            break
        tl = tl2

    # Batch images per step when per-step traffic is tiny (small spatial maps).
    nb = 1
    target_in_bytes = 512 * 1024
    for cand in range(2, n + 1):
        if n % cand:
            continue
        if (n // cand) * (hwp // tl) < 2:          # keep >= 2 grid steps
            break
        if 2 * cand * tl * (in_item * cin + out_item * cout) + w_bytes > budget:
            break
        nb = cand
        if cand * cin * tl * in_item >= target_in_bytes:
            break
    return nb, tl


# ----------------------------------------------------------------------------
# Public wrapper: PyTorch Conv2d(in_channels, out_channels, kernel_size=1)
# ----------------------------------------------------------------------------
def conv1x1(x_nchw, weight, bias, *, compute_dtype=jnp.float32,
            out_dtype=jnp.float32):
    """1x1 Conv2d with PyTorch semantics.

    x: (N, Cin, H, W);  weight: (Cout, Cin, 1, 1);  bias: (Cout,).
    compute_dtype=jnp.bfloat16 halves HBM read traffic (accumulation stays f32);
    out_dtype=jnp.bfloat16 additionally halves write traffic.
    """
    N, Cin, H, W = x_nchw.shape
    Cout = weight.shape[0]
    HW = H * W
    HWp = ((HW + 127) // 128) * 128  # pad lanes; never use a full-extent fallback

    x2 = x_nchw.reshape(N, Cin, HW).astype(compute_dtype)
    if HWp != HW:
        x2 = jnp.pad(x2, ((0, 0), (0, 0), (0, HWp - HW)))
    w2 = weight.reshape(Cout, Cin).astype(compute_dtype)
    b2 = bias.reshape(Cout, 1).astype(jnp.float32)

    in_item = jnp.dtype(compute_dtype).itemsize
    out_item = jnp.dtype(out_dtype).itemsize
    budget = _vmem_budget_bytes()
    nb, tl = _choose_tiling(N, Cin, Cout, HWp, in_item, out_item, budget)
    grid = (N // nb, HWp // tl)

    ws = 2 * nb * tl * (in_item * Cin + out_item * Cout)
    w_bytes = Cout * Cin * in_item + Cout * 4
    vmem_limit = int(min(max(2 * (ws + w_bytes), 8 * 1024 * 1024), 2 * budget))

    out = pl.pallas_call(
        _conv1x1_kernel,
        out_shape=jax.ShapeDtypeStruct((N, Cout, HWp), out_dtype),
        grid=grid,
        in_specs=[
            pl.BlockSpec((nb, Cin, tl), lambda n, t: (n, 0, t)),
            pl.BlockSpec((Cout, Cin), lambda n, t: (0, 0)),
            pl.BlockSpec((Cout, 1), lambda n, t: (0, 0)),
        ],
        out_specs=pl.BlockSpec((nb, Cout, tl), lambda n, t: (n, 0, t)),
        compiler_params=pltpu.CompilerParams(
            dimension_semantics=("parallel", "parallel"),
            vmem_limit_bytes=vmem_limit,
        ),
    )(x2, w2, b2)

    if HWp != HW:
        out = out[:, :, :HW]
    return out.reshape(N, Cout, H, W)


# ----------------------------------------------------------------------------
# Module-equivalent wrapper:  FinalConvLayer(in_channels, out_channels).forward
# ----------------------------------------------------------------------------
def final_conv_layer_forward(params, x_nchw):
    return conv1x1(x_nchw, params["w"], params["b"])


def init_final_conv_layer(key, in_channels, out_channels):
    kw, kb = jax.random.split(key)
    # matches torch Conv2d weight/bias shapes for kernel_size=1
    w = 0.1 * jax.random.normal(kw, (out_channels, in_channels, 1, 1), jnp.float32)
    b = 0.1 * jax.random.normal(kb, (out_channels,), jnp.float32)
    return {"w": w, "b": b}


if __name__ == "__main__":
    key = jax.random.PRNGKey(0)
    pkey, xkey = jax.random.split(key)

    N, Cin, H, W = 2, 4, 16, 16
    Cout = 3
    params = init_final_conv_layer(pkey, Cin, Cout)
    x = jax.random.normal(xkey, (N, Cin, H, W), dtype=jnp.float32)

    fwd = jax.jit(final_conv_layer_forward)
    y = fwd(params, x)
    jax.block_until_ready(y)

    # pure-JAX reference (f32 Conv2d semantics)
    ref = (
        jnp.einsum("nchw,oc->nohw", x, params["w"].reshape(Cout, Cin))
        + params["b"].reshape(1, Cout, 1, 1)
    )

    assert y.shape == (N, Cout, H, W), y.shape
    assert jnp.all(jnp.isfinite(y))
    assert jnp.allclose(y, ref, atol=1e-5, rtol=1e-5)
    print("KERNEL_OK")
</pallas_src>

<mosaic_0001>
module attributes {stable_mosaic.version = 11 : i64} {
  func.func @_conv1x1_kernel(%arg0: i32, %arg1: i32, %arg2: memref<2x4x128xf32, #tpu.memory_space<vmem>>, %arg3: memref<3x4xf32, #tpu.memory_space<vmem>>, %arg4: memref<3x1xf32, #tpu.memory_space<vmem>>, %arg5: memref<2x3x128xf32, #tpu.memory_space<vmem>>) attributes {dimension_semantics = [#tpu.dimension_semantics<parallel>, #tpu.dimension_semantics<parallel>], iteration_bounds = array<i64: 1, 2>, scalar_prefetch = 0 : i64, scratch_operands = 0 : i64, tpu.core_type = #tpu.core_type<tc>, window_params = [{transform_indices = @transform_0, window_bounds = array<i64: 2, 4, 128>}, {pipeline_mode = #tpu.pipeline_mode<synchronous>, transform_indices = @transform_1, window_bounds = array<i64: 3, 4>}, {pipeline_mode = #tpu.pipeline_mode<synchronous>, transform_indices = @transform_2, window_bounds = array<i64: 3, 1>}, {transform_indices = @transform_3, window_bounds = array<i64: 2, 3, 128>}]} {
    %c0 = arith.constant 0 : index
    %c0_0 = arith.constant 0 : index
    %0 = vector.load %arg3[%c0, %c0_0] : memref<3x4xf32, #tpu.memory_space<vmem>>, vector<3x4xf32>
    %c0_1 = arith.constant 0 : index
    %c0_2 = arith.constant 0 : index
    %1 = vector.load %arg4[%c0_1, %c0_2] : memref<3x1xf32, #tpu.memory_space<vmem>>, vector<3x1xf32>
    %c0_3 = arith.constant 0 : index
    %c0_4 = arith.constant 0 : index
    %c0_5 = arith.constant 0 : index
    %2 = vector.load %arg2[%c0_3, %c0_4, %c0_5] : memref<2x4x128xf32, #tpu.memory_space<vmem>>, vector<1x4x128xf32>
    %3 = vector.shape_cast %2 : vector<1x4x128xf32> to vector<4x128xf32>
    %cst = arith.constant dense<0.000000e+00> : vector<3x128xf32>
    %4 = tpu.matmul %0, %3, %cst {dimension_numbers = #tpu.dot_dimension_numbers<[1], [0], [0], [1], [0, 0, 1, 1], [], []>} : vector<3x4xf32>, vector<4x128xf32>, vector<3x128xf32> -> vector<3x128xf32>
    %5 = vector.broadcast %1 : vector<3x1xf32> to vector<3x128xf32>
    %6 = arith.addf %4, %5 : vector<3x128xf32>
    %c0_6 = arith.constant 0 : index
    %c0_7 = arith.constant 0 : index
    %c0_8 = arith.constant 0 : index
    %7 = vector.load %arg5[%c0_6, %c0_7, %c0_8] : memref<2x3x128xf32, #tpu.memory_space<vmem>>, vector<1x3x128xf32>
    %8 = vector.shape_cast %7 : vector<1x3x128xf32> to vector<3x128xf32>
    %9 = vector.shape_cast %6 : vector<3x128xf32> to vector<1x3x128xf32>
    tpu.vector_store %arg5[%c0_6, %c0_7, %c0_8], %9 {strides = array<i32>} : memref<2x3x128xf32, #tpu.memory_space<vmem>>, vector<1x3x128xf32>,
    %c1 = arith.constant 1 : index
    %c0_9 = arith.constant 0 : index
    %c0_10 = arith.constant 0 : index
    %10 = vector.load %arg2[%c1, %c0_9, %c0_10] : memref<2x4x128xf32, #tpu.memory_space<vmem>>, vector<1x4x128xf32>
    %11 = vector.shape_cast %10 : vector<1x4x128xf32> to vector<4x128xf32>
    %cst_11 = arith.constant dense<0.000000e+00> : vector<3x128xf32>
    %12 = tpu.matmul %0, %11, %cst_11 {dimension_numbers = #tpu.dot_dimension_numbers<[1], [0], [0], [1], [0, 0, 1, 1], [], []>} : vector<3x4xf32>, vector<4x128xf32>, vector<3x128xf32> -> vector<3x128xf32>
    %13 = vector.broadcast %1 : vector<3x1xf32> to vector<3x128xf32>
    %14 = arith.addf %12, %13 : vector<3x128xf32>
    %c1_12 = arith.constant 1 : index
    %c0_13 = arith.constant 0 : index
    %c0_14 = arith.constant 0 : index
    %15 = vector.load %arg5[%c1_12, %c0_13, %c0_14] : memref<2x3x128xf32, #tpu.memory_space<vmem>>, vector<1x3x128xf32>
    %16 = vector.shape_cast %15 : vector<1x3x128xf32> to vector<3x128xf32>
    %17 = vector.shape_cast %14 : vector<3x128xf32> to vector<1x3x128xf32>
    tpu.vector_store %arg5[%c1_12, %c0_13, %c0_14], %17 {strides = array<i32>} : memref<2x3x128xf32, #tpu.memory_space<vmem>>, vector<1x3x128xf32>,
    return
  }
  func.func @transform_0(%arg0: i32, %arg1: i32) -> (i32, i32, i32) {
    %c0_i32 = arith.constant 0 : i32
    %c0_i32_0 = arith.constant 0 : i32
    return %arg0, %c0_i32, %arg1 : i32, i32, i32
  }
  func.func @transform_1(%arg0: i32, %arg1: i32) -> (i32, i32) {
    %c0_i32 = arith.constant 0 : i32
    %c0_i32_0 = arith.constant 0 : i32
    %c0_i32_1 = arith.constant 0 : i32
    return %c0_i32, %c0_i32_0 : i32, i32
  }
  func.func @transform_2(%arg0: i32, %arg1: i32) -> (i32, i32) {
    %c0_i32 = arith.constant 0 : i32
    %c0_i32_0 = arith.constant 0 : i32
    %c0_i32_1 = arith.constant 0 : i32
    return %c0_i32, %c0_i32_0 : i32, i32
  }
  func.func @transform_3(%arg0: i32, %arg1: i32) -> (i32, i32, i32) {
    %c0_i32 = arith.constant 0 : i32
    %c0_i32_0 = arith.constant 0 : i32
    return %arg0, %c0_i32, %arg1 : i32, i32, i32
  }
}

</mosaic_0001>

<llo_original>
// kernel: final_conv_layer_forward.1
$region0: #{final_conv_layer_forward.1}
  #allocation0 [shape = 'u32[]', space=smem, size = 0x4, offset = 0x4, fixed_abs, tag = 'smem constant byte address 0x4 - core index']
  #allocation1 [shape = 'u32[72,128]{1,0:T(1,128)}', space=vmem, size = 0x9000, scoped, tag = 'internal scratch']
  %s0 = inlined_call_operand.vmem [shape: f32[2,4,256], index: 0, kind: input, shape index: {}]
  %s1 = inlined_call_operand.vmem [shape: f32[3,4], index: 1, kind: input, shape index: {}]
  %s2 = inlined_call_operand.vmem [shape: f32[3,1], index: 2, kind: input, shape index: {}]
  %s3 = inlined_call_operand.vmem [shape: f32[2,3,256], index: 3, kind: output, shape index: {}]
  %s4 = sld [smem:[#allocation0]]
  $region123: #{final_conv_layer_forward.1} parent=0
    _
  %s6 = ssub.s32 1, %s4
  %s7 = scalar_select 0, %s6, %s4
  $region1: #{final_conv_layer_forward.1} parent=0
    #allocation2 [shape = 'u8[8192]{0}', space=vmem, size = 0x2000, scoped, tag = 'input window, operand 0']
    #allocation3 [shape = 'u8[8192]{0}', space=vmem, size = 0x2000, scoped, tag = 'output window, operand 0']
    loop: start=0, step=1, limit=4
    $region2: #{final_conv_layer_forward.1} parent=1 // loop_pre_header
      _
    $region3: #{final_conv_layer_forward.1} parent=1 // loop_header
      %s9 = sphi 0, %s13
      %p10 = scmp.ge.s32.totalorder %s9, 4
      %s16 = sphi 0, %s28
      %s17 = sphi 0, %s24
      %s18 = sphi 0, %s16
      %s19 = sphi 0, %s17
      %s20 = sphi 0, %s18
      %s21 = sphi 0, %s19
      %s33 = sphi 0, %s35
      %s36 = sphi 0, %s33
      %s37 = sphi 0, %s36
      %s53 = sphi 0, %s37
      %s57 = sphi 0, %s57
      %s59 = sphi 0, %s57
      %s60 = sphi 0, %s59
      %s74 = sphi 0, %s60
      %s78 = sphi 0, %s78
      %s80 = sphi 0, %s78
      %s81 = sphi 0, %s80
      %s95 = sphi 0, %s81
      %s103 = sphi 0, %s105
      %s106 = sphi 0, %s103
      %s107 = sphi 0, %s106
      %s123 = sphi 0, %s107
    $region4: #{final_conv_layer_forward.1} parent=1 // loop_header_branch
      %12 = sbr.rel (%p10) target = $region8
    $region5: #{final_conv_layer_forward.1} parent=1 // loop_body
      %s14 = ssub.s32 %s9, 1
      %s15 = ssub.s32 %s9, 2
      %s22 = sadd.s32 1, %s17
      %p23 = scmp.ge.s32.totalorder %s22, 2
      %s24 = scalar_select %p23, 0, %s22
      %s25 = sadd.s32 1, %s16
      %s26 = scalar_select %p23, %s25, %s16
      %p27 = scmp.ge.s32.totalorder %s26, 1
      %s28 = scalar_select %p27, 0, %s26
      %s29 = ssub.s32 %s16, %s28
      %s30 = ssub.s32 %s17, %s24
      %s31 = sor.u32 %s29, %s30
      %p32 = scmp.eq.s32.totalorder %s31, 0
      %s34 = sadd.s32 %s33, 1
      %s35 = scalar_select %p32, %s33, %s34
      %p38 = pneg %p32
      %p39 = scmp.eq.s32.totalorder %s9, 1
      %p40 = por %p38, %p39
      %p41 = scmp.ne.s32.totalorder %s33, %s36
      %p42 = scmp.eq.s32.totalorder %s9, 0
      %p43 = por %p41, %p42
      %p44 = scmp.ne.s32.totalorder %s33, %s36
      %p45 = scmp.eq.s32.totalorder %s14, 1
      %p46 = por %p44, %p45
      %p47 = scmp.ne.s32.totalorder %s36, %s37
      %p48 = scmp.eq.s32.totalorder %s14, 0
      %p49 = por %p47, %p48
      %p50 = scmp.ne.s32.totalorder %s36, %s37
      %p51 = scmp.eq.s32.totalorder %s15, 1
      %p52 = por %p50, %p51
      %p54 = scmp.ne.s32.totalorder %s37, %s53
      %p55 = scmp.eq.s32.totalorder %s15, 0
      %p56 = por %p54, %p55
      %s58 = sadd.s32 %s57, 1
      %p61 = scmp.eq.s32.totalorder %s9, 1
      %p62 = scmp.ne.s32.totalorder %s57, %s59
      %p63 = scmp.eq.s32.totalorder %s9, 0
      %p64 = por %p62, %p63
      %p65 = scmp.ne.s32.totalorder %s57, %s59
      %p66 = scmp.eq.s32.totalorder %s14, 1
      %p67 = por %p65, %p66
      %p68 = scmp.ne.s32.totalorder %s59, %s60
      %p69 = scmp.eq.s32.totalorder %s14, 0
      %p70 = por %p68, %p69
      %p71 = scmp.ne.s32.totalorder %s59, %s60
      %p72 = scmp.eq.s32.totalorder %s15, 1
      %p73 = por %p71, %p72
      %p75 = scmp.ne.s32.totalorder %s60, %s74
      %p76 = scmp.eq.s32.totalorder %s15, 0
      %p77 = por %p75, %p76
      %s79 = sadd.s32 %s78, 1
      %p82 = scmp.eq.s32.totalorder %s9, 1
      %p83 = scmp.ne.s32.totalorder %s78, %s80
      %p84 = scmp.eq.s32.totalorder %s9, 0
      %p85 = por %p83, %p84
      %p86 = scmp.ne.s32.totalorder %s78, %s80
      %p87 = scmp.eq.s32.totalorder %s14, 1
      %p88 = por %p86, %p87
      %p89 = scmp.ne.s32.totalorder %s80, %s81
      %p90 = scmp.eq.s32.totalorder %s14, 0
      %p91 = por %p89, %p90
      %p92 = scmp.ne.s32.totalorder %s80, %s81
      %p93 = scmp.eq.s32.totalorder %s15, 1
      %p94 = por %p92, %p93
      %p96 = scmp.ne.s32.totalorder %s81, %s95
      %p97 = scmp.eq.s32.totalorder %s15, 0
      %p98 = por %p96, %p97
      %s99 = ssub.s32 %s16, %s28
      %s100 = ssub.s32 %s17, %s24
      %s101 = sor.u32 %s99, %s100
      %p102 = scmp.eq.s32.totalorder %s101, 0
      %s104 = sadd.s32 %s103, 1
      %s105 = scalar_select %p102, %s103, %s104
      %p108 = pneg %p102
      %p109 = scmp.eq.s32.totalorder %s9, 1
      %p110 = por %p108, %p109
      %p111 = scmp.ne.s32.totalorder %s103, %s106
      %p112 = scmp.eq.s32.totalorder %s9, 0
      %p113 = por %p111, %p112
      %p114 = scmp.ne.s32.totalorder %s103, %s106
      %p115 = scmp.eq.s32.totalorder %s14, 1
      %p116 = por %p114, %p115
      %p117 = scmp.ne.s32.totalorder %s106, %s107
      %p118 = scmp.eq.s32.totalorder %s14, 0
      %p119 = por %p117, %p118
      %p120 = scmp.ne.s32.totalorder %s106, %s107
      %p121 = scmp.eq.s32.totalorder %s15, 1
      %p122 = por %p120, %p121
      %p124 = scmp.ne.s32.totalorder %s107, %s123
      %p125 = scmp.eq.s32.totalorder %s15, 0
      %p126 = por %p124, %p125
      %p127 = scmp.le.s32.totalorder 1, %s9
      %p128 = scmp.lt.s32.totalorder %s9, 3
      %p129 = pnand %p127, %p128
      %p130 = pneg %p129
      // Predicated region
      $region9: #{final_conv_layer_forward.1} parent=5 // pred_check
        _
      $region10: #{final_conv_layer_forward.1} parent=5 // pred_check_branch
        %132 = sbr.rel (%p129) target = $region12
      $region11: #{final_conv_layer_forward.1} parent=5 // pred_region
        %s133 = ssub.s32 %s9, 1
        // Predicated region
        $region13: #{final_conv_layer_forward.1} parent=11 // pred_check
          %p134 = pneg %p70
        $region14: #{final_conv_layer_forward.1} parent=11 // pred_check_branch
          %136 = sbr.rel (%p134) target = $region16
        $region15: #{final_conv_layer_forward.1} parent=11 // pred_region
          _
        $region16: #{final_conv_layer_forward.1} parent=11 // pred_fallthru
          _
        // Predicated region
        $region17: #{final_conv_layer_forward.1} parent=11 // pred_check
          %p137 = pneg %p91
        $region18: #{final_conv_layer_forward.1} parent=11 // pred_check_branch
          %139 = sbr.rel (%p137) target = $region20
        $region19: #{final_conv_layer_forward.1} parent=11 // pred_region
          _
        $region20: #{final_conv_layer_forward.1} parent=11 // pred_fallthru
          _
      $region12: #{final_conv_layer_forward.1} parent=5 // pred_fallthru
        _
      %p140 = scmp.lt.s32.totalorder %s9, 2
      // Predicated region
      $region21: #{final_conv_layer_forward.1} parent=5 // pred_check
        %p141 = pneg %p140
      $region22: #{final_conv_layer_forward.1} parent=5 // pred_check_branch
        %143 = sbr.rel (%p141) target = $region24
      $region23: #{final_conv_layer_forward.1} parent=5 // pred_region
        // Predicated region
        $region25: #{final_conv_layer_forward.1} parent=23 // pred_check
          %p144 = pneg %p43
        $region26: #{final_conv_layer_forward.1} parent=23 // pred_check_branch
          %146 = sbr.rel (%p144) target = $region28
        $region27: #{final_conv_layer_forward.1} parent=23 // pred_region
          %s147 = sand.u32 %s33, 1
          %s148 = sand.u32 %s33, 1
          %s149 = smul.addr %s148, 8
          %s150 = scalar_lea.vmem [#allocation2], %s149
          %s151 = smul.u32 2, %s16
          %s152 = smul.addr %s151, 2
          %s153 = sadd.s32 %s17, %s152
          %s154 = smul.addr %s153, 4
          %s155 = scalar_lea.vmem %s0, %s154
          // Predicated region
          $region29: #{final_conv_layer_forward.1} parent=27 // pred_check
            _
          $region30: #{final_conv_layer_forward.1} parent=27 // pred_check_branch
            %157 = sbr.rel (0) target = $region32
          $region31: #{final_conv_layer_forward.1} parent=27 // pred_region
            // Predicated region
            $region33: #{final_conv_layer_forward.1} parent=31 // pred_check
              _
            $region34: #{final_conv_layer_forward.1} parent=31 // pred_check_branch
              %159 = sbr.rel target = $region36
            $region35: #{final_conv_layer_forward.1} parent=31 // pred_region
              // Predicated region
              $region48: #{final_conv_layer_forward.1} parent=35 // pred_check
                _
              $region49: #{final_conv_layer_forward.1} parent=35 // pred_check_branch
                %177 = sbr.rel (0) target = $region51
              $region50: #{final_conv_layer_forward.1} parent=35 // pred_region
                loop: start=0, step=1, limit=1
                $region52: #{final_conv_layer_forward.1} parent=50 // loop_pre_header
                  _
                $region53: #{final_conv_layer_forward.1} parent=50 // loop_header
                  %s179 = sphi 0, %s183
                  %p180 = scmp.ge.s32.totalorder %s179, 1
                  %s184 = sphi %s155, %s155
                  %s185 = sphi %s150, %s150
                $region54: #{final_conv_layer_forward.1} parent=50 // loop_header_branch
                  %182 = sbr.rel (%p180) target = $region58
                $region55: #{final_conv_layer_forward.1} parent=50 // loop_body
                  _
                $region56: #{final_conv_layer_forward.1} parent=50 // loop_footer
                  %s183 = sadd.s32 1, %s179
                $region57: #{final_conv_layer_forward.1} parent=50 // loop_footer_branch
                  %178 = sbr.rel target = $region53
                $region58: #{final_conv_layer_forward.1} parent=50 // loop_exit
                  _
                %s187 = ssub.s32 16, 1
                loop: start=0, step=1, limit=1
                $region59: #{final_conv_layer_forward.1} parent=50 // loop_pre_header
                  _
                $region60: #{final_conv_layer_forward.1} parent=50 // loop_header
                  %s189 = sphi 0, %s193
                  %p190 = scmp.ge.s32.totalorder %s189, 1
                  %s194 = sphi %s155, %s155
                  %s195 = sphi %s150, %s150
                $region61: #{final_conv_layer_forward.1} parent=50 // loop_header_branch
                  %192 = sbr.rel (%p190) target = $region65
                $region62: #{final_conv_layer_forward.1} parent=50 // loop_body
                  %v196 = vld [vmem:[%s194] sm:%s187]
                  %197 = vst [vmem:[%s195] sm:%s187] %v196
                  %v198 = vld [vmem:[%s194 + $0x8] sm:%s187]
                  %199 = vst [vmem:[%s195 + $0x4] sm:%s187] %v198
                $region63: #{final_conv_layer_forward.1} parent=50 // loop_footer
                  %s193 = sadd.s32 1, %s189
                $region64: #{final_conv_layer_forward.1} parent=50 // loop_footer_branch
                  %188 = sbr.rel target = $region60
                $region65: #{final_conv_layer_forward.1} parent=50 // loop_exit
                  _
              $region51: #{final_conv_layer_forward.1} parent=35 // pred_fallthru
                _
            $region36: #{final_conv_layer_forward.1} parent=31 // pred_fallthru
              _
            // Predicated region
            $region37: #{final_conv_layer_forward.1} parent=31 // pred_check
              _
            $region38: #{final_conv_layer_forward.1} parent=31 // pred_check_branch
              %161 = sbr.rel (0) target = $region40
            $region39: #{final_conv_layer_forward.1} parent=31 // pred_region
              %s163 = ssub.s32 16, 1
              loop: start=0, step=1, limit=1
              $region41: #{final_conv_layer_forward.1} parent=39 // loop_pre_header
                _
              $region42: #{final_conv_layer_forward.1} parent=39 // loop_header
                %s165 = sphi 0, %s169
                %p166 = scmp.ge.s32.totalorder %s165, 1
                %s170 = sphi %s155, %s155
                %s171 = sphi %s150, %s150
              $region43: #{final_conv_layer_forward.1} parent=39 // loop_header_branch
                %168 = sbr.rel (%p166) target = $region47
              $region44: #{final_conv_layer_forward.1} parent=39 // loop_body
                %v172 = vld [vmem:[%s170] sm:%s163]
                %173 = vst [vmem:[%s171] sm:%s163] %v172
                %v174 = vld [vmem:[%s170 + $0x8] sm:%s163]
                %175 = vst [vmem:[%s171 + $0x4] sm:%s163] %v174
              $region45: #{final_conv_layer_forward.1} parent=39 // loop_footer
                %s169 = sadd.s32 1, %s165
              $region46: #{final_conv_layer_forward.1} parent=39 // loop_footer_branch
                %164 = sbr.rel target = $region42
              $region47: #{final_conv_layer_forward.1} parent=39 // loop_exit
                _
            $region40: #{final_conv_layer_forward.1} parent=31 // pred_fallthru
              _
          $region32: #{final_conv_layer_forward.1} parent=27 // pred_fallthru
            _
          %200 = vnop
        $region28: #{final_conv_layer_forward.1} parent=23 // pred_fallthru
          _
      $region24: #{final_conv_layer_forward.1} parent=5 // pred_fallthru
        _
      %p201 = scmp.le.s32.totalorder 1, %s9
      %p202 = scmp.lt.s32.totalorder %s9, 3
      %p203 = pnand %p201, %p202
      %p204 = pneg %p203
      // Predicated region
      $region66: #{final_conv_layer_forward.1} parent=5 // pred_check
        _
      $region67: #{final_conv_layer_forward.1} parent=5 // pred_check_branch
        %206 = sbr.rel (%p203) target = $region69
      $region68: #{final_conv_layer_forward.1} parent=5 // pred_region
        %s207 = ssub.s32 %s9, 1
        %s208 = sand.u32 %s36, 1
        %s209 = sand.u32 %s36, 1
        %s210 = smul.addr %s209, 8
        %s211 = scalar_lea.vmem [#allocation2], %s210
        // Predicated region
        $region70: #{final_conv_layer_forward.1} parent=68 // pred_check
          %p212 = pneg %p49
        $region71: #{final_conv_layer_forward.1} parent=68 // pred_check_branch
          %214 = sbr.rel (%p212) target = $region73
        $region72: #{final_conv_layer_forward.1} parent=68 // pred_region
          _
        $region73: #{final_conv_layer_forward.1} parent=68 // pred_fallthru
          _
        %s215 = sand.u32 %s36, 1
        %s216 = sand.u32 %s36, 1
        %s217 = smul.addr %s216, 8
        %s218 = scalar_lea.vmem [#allocation2], %s217
        %p219 = pneg %p49
        %p220 = pneg %p46
        %p221 = pneg %p70
        %p222 = pneg %p67
        %p223 = pneg %p91
        %p224 = pneg %p88
        %p225 = pneg %p119
        %p226 = pneg %p116
        %s227 = sand.u32 %s106, 1
        %s228 = sand.u32 %s106, 1
        %s229 = smul.addr %s228, 8
        %s230 = scalar_lea.vmem [#allocation3], %s229
        %s231 = smul.u32 2, %s18
        %s232 = smul.u32 2, %s18
        %v233 = vld [vmem:[%s1] sm:$0x7]
        %v234 = vld [vmem:[%s2] sm:$0x7]
        %v235 = vld [vmem:[%s211] sm:$0xf]
        %237 = vset.pattern.permute.xlu0 0
        %238 = vperm.xlu0 %237, %v234
        %v239 = vpop.permute.xlu0 %238
        %vm241 = vcmask 31744
        %v243 = vsel %vm241, %v233, 0
        %vm245 = vcmask 1043456
        %v247 = vsel %vm245, %v235, 0
        %249 = vmatpush.msra.mxu0 0.0
        %250 = vmatpush.msra.mxu0 0.0
        %251 = vmatpush.msra.mxu0 0.0
        %252 = vmatpush.msra.mxu0 0.0
        %253 = vmatpush.msra.mxu0 0.0
        %254 = vmatpush.msra.mxu0 0.0
        %255 = vmatpush.msra.mxu0 0.0
        %256 = vmatpush.msra.mxu0 0.0
        %257 = vmatpush.msra.mxu0 0.0
        %258 = vmatpush.msra.mxu0 0.0
        %259 = vmatpush.msra.mxu0 0.0
        %260 = vmatpush.msra.mxu0 0.0
        %261 = vmatpush.msra.mxu0 0.0
        %262 = vmatpush.msra.mxu0 0.0
        %263 = vmatpush.msra.mxu0 0.0
        %264 = vmatpush.msra.mxu0 %v247
        %265 = vmatmul.f32.gmra.mxu0 %v243
        %v266 = vpop.f32.mrf.mxu0
        %v267 = vadd.f32 %v239, %v266
        %268 = vdwg.mxu0
        %269 = vst [vmem:[%s230] sm:$0x7] %v267
        %s270 = scalar_lea.vmem %s211, 4 [#allocation2]
        %v271 = vld [vmem:[%s270] sm:$0xf]
        %v273 = vsel %vm245, %v271, 0
        %275 = vmatpush.msra.mxu0 0.0
        %276 = vmatpush.msra.mxu0 0.0
        %277 = vmatpush.msra.mxu0 0.0
        %278 = vmatpush.msra.mxu0 0.0
        %279 = vmatpush.msra.mxu0 0.0
        %280 = vmatpush.msra.mxu0 0.0
        %281 = vmatpush.msra.mxu0 0.0
        %282 = vmatpush.msra.mxu0 0.0
        %283 = vmatpush.msra.mxu0 0.0
        %284 = vmatpush.msra.mxu0 0.0
        %285 = vmatpush.msra.mxu0 0.0
        %286 = vmatpush.msra.mxu0 0.0
        %287 = vmatpush.msra.mxu0 0.0
        %288 = vmatpush.msra.mxu0 0.0
        %289 = vmatpush.msra.mxu0 0.0
        %290 = vmatpush.msra.mxu0 %v273
        %291 = vmatmul.f32.gmra.mxu0 %v243
        %v292 = vpop.f32.mrf.mxu0
        %v293 = vadd.f32 %v239, %v292
        %294 = vdwg.mxu0
        %s295 = scalar_lea.vmem %s230, 4 [#allocation3]
        %296 = vst [vmem:[%s295] sm:$0x7] %v293
        %s297 = sand.u32 %s106, 1
        %s298 = sand.u32 %s106, 1
        %s299 = smul.addr %s298, 8
        %s300 = scalar_lea.vmem [#allocation3], %s299
        // Predicated region
        $region74: #{final_conv_layer_forward.1} parent=68 // pred_check
          %p301 = pneg %p116
        $region75: #{final_conv_layer_forward.1} parent=68 // pred_check_branch
          %303 = sbr.rel (%p301) target = $region77
        $region76: #{final_conv_layer_forward.1} parent=68 // pred_region
          %s304 = smul.u32 2, %s18
          %s305 = smul.addr %s304, 2
          %s306 = sadd.s32 %s19, %s305
          %s307 = smul.addr %s306, 4
          %s308 = scalar_lea.vmem %s3, %s307
          // Predicated region
          $region78: #{final_conv_layer_forward.1} parent=76 // pred_check
            _
          $region79: #{final_conv_layer_forward.1} parent=76 // pred_check_branch
            %310 = sbr.rel (0) target = $region81
          $region80: #{final_conv_layer_forward.1} parent=76 // pred_region
            // Predicated region
            $region82: #{final_conv_layer_forward.1} parent=80 // pred_check
              _
            $region83: #{final_conv_layer_forward.1} parent=80 // pred_check_branch
              %312 = sbr.rel target = $region85
            $region84: #{final_conv_layer_forward.1} parent=80 // pred_region
              // Predicated region
              $region97: #{final_conv_layer_forward.1} parent=84 // pred_check
                _
              $region98: #{final_conv_layer_forward.1} parent=84 // pred_check_branch
                %330 = sbr.rel (0) target = $region100
              $region99: #{final_conv_layer_forward.1} parent=84 // pred_region
                loop: start=0, step=1, limit=1
                $region101: #{final_conv_layer_forward.1} parent=99 // loop_pre_header
                  _
                $region102: #{final_conv_layer_forward.1} parent=99 // loop_header
                  %s332 = sphi 0, %s336
                  %p333 = scmp.ge.s32.totalorder %s332, 1
                  %s337 = sphi %s300, %s300
                  %s338 = sphi %s308, %s308
                $region103: #{final_conv_layer_forward.1} parent=99 // loop_header_branch
                  %335 = sbr.rel (%p333) target = $region107
                $region104: #{final_conv_layer_forward.1} parent=99 // loop_body
                  _
                $region105: #{final_conv_layer_forward.1} parent=99 // loop_footer
                  %s336 = sadd.s32 1, %s332
                $region106: #{final_conv_layer_forward.1} parent=99 // loop_footer_branch
                  %331 = sbr.rel target = $region102
                $region107: #{final_conv_layer_forward.1} parent=99 // loop_exit
                  _
                %s340 = ssub.s32 16, 1
                loop: start=0, step=1, limit=1
                $region108: #{final_conv_layer_forward.1} parent=99 // loop_pre_header
                  _
                $region109: #{final_conv_layer_forward.1} parent=99 // loop_header
                  %s342 = sphi 0, %s346
                  %p343 = scmp.ge.s32.totalorder %s342, 1
                  %s347 = sphi %s300, %s300
                  %s348 = sphi %s308, %s308
                $region110: #{final_conv_layer_forward.1} parent=99 // loop_header_branch
                  %345 = sbr.rel (%p343) target = $region114
                $region111: #{final_conv_layer_forward.1} parent=99 // loop_body
                  %v349 = vld [vmem:[%s347] sm:%s340]
                  %350 = vst [vmem:[%s348] sm:%s340] %v349
                  %v351 = vld [vmem:[%s347 + $0x4] sm:%s340]
                  %352 = vst [vmem:[%s348 + $0x8] sm:%s340] %v351
                $region112: #{final_conv_layer_forward.1} parent=99 // loop_footer
                  %s346 = sadd.s32 1, %s342
                $region113: #{final_conv_layer_forward.1} parent=99 // loop_footer_branch
                  %341 = sbr.rel target = $region109
                $region114: #{final_conv_layer_forward.1} parent=99 // loop_exit
                  _
              $region100: #{final_conv_layer_forward.1} parent=84 // pred_fallthru
                _
            $region85: #{final_conv_layer_forward.1} parent=80 // pred_fallthru
              _
            // Predicated region
            $region86: #{final_conv_layer_forward.1} parent=80 // pred_check
              _
            $region87: #{final_conv_layer_forward.1} parent=80 // pred_check_branch
              %314 = sbr.rel (0) target = $region89
            $region88: #{final_conv_layer_forward.1} parent=80 // pred_region
              %s316 = ssub.s32 16, 1
              loop: start=0, step=1, limit=1
              $region90: #{final_conv_layer_forward.1} parent=88 // loop_pre_header
                _
              $region91: #{final_conv_layer_forward.1} parent=88 // loop_header
                %s318 = sphi 0, %s322
                %p319 = scmp.ge.s32.totalorder %s318, 1
                %s323 = sphi %s300, %s300
                %s324 = sphi %s308, %s308
              $region92: #{final_conv_layer_forward.1} parent=88 // loop_header_branch
                %321 = sbr.rel (%p319) target = $region96
              $region93: #{final_conv_layer_forward.1} parent=88 // loop_body
                %v325 = vld [vmem:[%s323] sm:%s316]
                %326 = vst [vmem:[%s324] sm:%s316] %v325
                %v327 = vld [vmem:[%s323 + $0x4] sm:%s316]
                %328 = vst [vmem:[%s324 + $0x8] sm:%s316] %v327
              $region94: #{final_conv_layer_forward.1} parent=88 // loop_footer
                %s322 = sadd.s32 1, %s318
              $region95: #{final_conv_layer_forward.1} parent=88 // loop_footer_branch
                %317 = sbr.rel target = $region91
              $region96: #{final_conv_layer_forward.1} parent=88 // loop_exit
                _
            $region89: #{final_conv_layer_forward.1} parent=80 // pred_fallthru
              _
          $region81: #{final_conv_layer_forward.1} parent=76 // pred_fallthru
            _
          %353 = vnop
        $region77: #{final_conv_layer_forward.1} parent=68 // pred_fallthru
          _
      $region69: #{final_conv_layer_forward.1} parent=5 // pred_fallthru
        _
      %p354 = scmp.le.s32.totalorder 2, %s9
      // Predicated region
      $region115: #{final_conv_layer_forward.1} parent=5 // pred_check
        %p355 = pneg %p354
      $region116: #{final_conv_layer_forward.1} parent=5 // pred_check_branch
        %357 = sbr.rel (%p355) target = $region118
      $region117: #{final_conv_layer_forward.1} parent=5 // pred_region
        %s358 = ssub.s32 %s9, 2
        // Predicated region
        $region119: #{final_conv_layer_forward.1} parent=117 // pred_check
          %p359 = pneg %p122
        $region120: #{final_conv_layer_forward.1} parent=117 // pred_check_branch
          %361 = sbr.rel (%p359) target = $region122
        $region121: #{final_conv_layer_forward.1} parent=117 // pred_region
          %s362 = sand.u32 %s107, 1
          %s363 = sand.u32 %s107, 1
          %s364 = smul.addr %s363, 8
          %s365 = scalar_lea.vmem [#allocation3], %s364
        $region122: #{final_conv_layer_forward.1} parent=117 // pred_fallthru
          _
      $region118: #{final_conv_layer_forward.1} parent=5 // pred_fallthru
        _
    $region6: #{final_conv_layer_forward.1} parent=1 // loop_footer
      %s13 = sadd.s32 1, %s9
    $region7: #{final_conv_layer_forward.1} parent=1 // loop_footer_branch
      %8 = sbr.rel target = $region3
    $region8: #{final_conv_layer_forward.1} parent=1 // loop_exit
      _

</llo_original>
